<compile_context>
chip_gen: v7x
topology: tpu7x:2x2x1
jax: 0.10.0
libtpu: 0.0.40
codegen_flags: <defaults>
</compile_context>

<pallas_src>
import functools

import numpy as np
import jax
import jax.numpy as jnp
from jax.experimental import pallas as pl
from jax.experimental.pallas import tpu as pltpu


def basic_block_kernel(x_ref, b1_ref, b2_ref, s1_ref, t1_ref, s2_ref, t2_ref,
                       out_ref, *, H):
    """Fused basic block on a (rows = nb*H, lanes = W*C) tile.

    x_ref  : (R, W*Cin)          f32   input rows (batch folded into rows)
    b1_ref : (3, W*Cin, W*Cout)  bf16  banded conv1 weights (one slab per ky)
    b2_ref : (3, W*Cout, W*Cout) bf16  banded conv2 weights
    s*_ref : (1, W*Cout)         f32   folded BN scale (tiled across W)
    t*_ref : (1, W*Cout)         f32   folded BN shift (tiled across W)
    out_ref: (R, W*Cout)         f32
    """
    x = x_ref[...]
    R = x.shape[0]
    # Row-within-image index, used to mask the vertical halo taps at the
    # top/bottom image boundary (replaces physical zero-padding).
    y = jax.lax.broadcasted_iota(jnp.int32, (R, 1), 0) % H

    def conv3x3(inp, bmat_ref):
        # Centre tap (ky = 1): no shift, no mask.
        acc = jnp.dot(inp.astype(jnp.bfloat16), bmat_ref[1],
                      preferred_element_type=jnp.float32)
        # Vertical halo taps (ky = 0, 2): sublane roll + boundary mask.
        for ky in (0, 2):
            dy = ky - 1
            shifted = pltpu.roll(inp, shift=(-dy) % R, axis=0)
            valid = jnp.logical_and(y + dy >= 0, y + dy < H)
            shifted = jnp.where(valid, shifted, 0.0)
            acc = acc + jnp.dot(shifted.astype(jnp.bfloat16), bmat_ref[ky],
                                preferred_element_type=jnp.float32)
        return acc

    # conv1 -> bn1 -> relu
    h = conv3x3(x, b1_ref)
    h = jnp.maximum(h * s1_ref[...] + t1_ref[...], 0.0)
    # conv2 -> bn2 -> +residual -> relu
    h = conv3x3(h, b2_ref)
    h = h * s2_ref[...] + t2_ref[...]
    out_ref[...] = jnp.maximum(h + x, 0.0)  # residual add (Cin == Cout)


def _banded_weights(w, W):
    """w: (3,3,Cin,Cout) HWIO -> (3, W*Cin, W*Cout) bf16 banded matrices.

    B[ky, x_in*Cin + ci, x_out*Cout + co] = w[ky, x_in - x_out + 1, ci, co]
    when 0 <= x_in - x_out + 1 < 3, else 0.  The zero band encodes the
    horizontal "same" padding, so only vertical taps need in-kernel masking.
    """
    _, _, Cin, Cout = w.shape
    x_in = np.arange(W)[None, :, None]
    x_out = np.arange(W)[None, None, :]
    kx = np.arange(3)[:, None, None]
    sel = jnp.asarray((x_in == x_out + kx - 1).astype(np.float32))
    b = jnp.einsum('pxq,kpio->kxiqo', sel, w.astype(jnp.float32))
    return b.reshape(3, W * Cin, W * Cout).astype(jnp.bfloat16)


def snn_basic_block(x, w1, w2, bn1, bn2, eps=1e-5):
    """x: (N,H,W,C) f32; w1: (3,3,C,P) HWIO; w2: (3,3,P,P); bn*: (gamma,beta,mean,var)."""
    N, H, W, Cin = x.shape
    Cout = w1.shape[-1]
    assert Cin == Cout, "residual add requires inplanes == planes (downsample=None)"
    assert H % 8 == 0, "H must be a multiple of 8 for the row-folded block layout"
    # Lane width W*Cout: a multiple of 128 gives fully dense (unmasked) stores.

    # Eval-mode BatchNorm folded into per-channel scale/shift, tiled across W
    # so it broadcasts along the W*C lane axis.
    def fold(bn):
        g, b, m, v = bn
        s = g / jnp.sqrt(v + eps)
        t = b - m * s
        return (jnp.tile(s, W).reshape(1, W * Cout).astype(jnp.float32),
                jnp.tile(t, W).reshape(1, W * Cout).astype(jnp.float32))

    s1, t1 = fold(bn1)
    s2, t2 = fold(bn2)
    b1 = _banded_weights(w1, W)
    b2 = _banded_weights(w2, W)

    # Lane-dense 2D view: rows = N*H, lanes = W*C (free reshape in the wrapper).
    x2 = x.reshape(N * H, W * Cin)

    # Batch sub-block (divisor of N): keep the per-step footprint modest for
    # v7x's smaller VMEM while still amortizing per-grid-step overhead.
    per_elem_bytes = H * W * (Cin + 3 * Cout) * 4
    nb = N
    while nb > 1 and nb * per_elem_bytes > (8 << 20):
        nb -= 1
        while N % nb:
            nb -= 1
    rows = nb * H

    kernel = functools.partial(basic_block_kernel, H=H)
    out2 = pl.pallas_call(
        kernel,
        out_shape=jax.ShapeDtypeStruct((N * H, W * Cout), jnp.float32),
        grid_spec=pltpu.PrefetchScalarGridSpec(
            num_scalar_prefetch=0,
            grid=(N // nb,),
            in_specs=[
                pl.BlockSpec((rows, W * Cin), lambda n: (n, 0)),
                pl.BlockSpec((3, W * Cin, W * Cout), lambda n: (0, 0, 0)),
                pl.BlockSpec((3, W * Cout, W * Cout), lambda n: (0, 0, 0)),
                pl.BlockSpec((1, W * Cout), lambda n: (0, 0)),
                pl.BlockSpec((1, W * Cout), lambda n: (0, 0)),
                pl.BlockSpec((1, W * Cout), lambda n: (0, 0)),
                pl.BlockSpec((1, W * Cout), lambda n: (0, 0)),
            ],
            out_specs=pl.BlockSpec((rows, W * Cout), lambda n: (n, 0)),
        ),
        compiler_params=pltpu.CompilerParams(
            dimension_semantics=("parallel",)),
    )(x2, b1, b2, s1, t1, s2, t2)

    return out2.reshape(N, H, W, Cout)


def reference_block(x, w1, w2, bn1, bn2, eps=1e-5):
    """Pure-JAX reference matching the PyTorch forward (eval-mode BN)."""
    dn = ("NHWC", "HWIO", "NHWC")

    def conv(a, w):
        return jax.lax.conv_general_dilated(
            a, w, (1, 1), ((1, 1), (1, 1)), dimension_numbers=dn,
            precision=jax.lax.Precision.HIGHEST)

    g1, b1, m1, v1 = bn1
    g2, b2, m2, v2 = bn2
    o = conv(x, w1)
    o = (o - m1) / jnp.sqrt(v1 + eps) * g1 + b1
    o = jnp.maximum(o, 0.0)
    o = conv(o, w2)
    o = (o - m2) / jnp.sqrt(v2 + eps) * g2 + b2
    o = jnp.maximum(o + x, 0.0)
    return o


if __name__ == "__main__":
    # Small deterministic setup: inplanes = planes = 8, spatial 16x16, batch 2.
    N, H, W, C = 2, 16, 16, 8
    P = C  # planes == inplanes (downsample=None)

    key = jax.random.PRNGKey(0)
    kx, kw1, kw2, kg1, kb1, km1, kv1, kg2, kb2, km2, kv2 = jax.random.split(key, 11)

    x = jax.random.normal(kx, (N, H, W, C), dtype=jnp.float32)
    w1 = 0.2 * jax.random.normal(kw1, (3, 3, C, P), dtype=jnp.float32)
    w2 = 0.2 * jax.random.normal(kw2, (3, 3, P, P), dtype=jnp.float32)

    bn1 = (1.0 + 0.1 * jax.random.normal(kg1, (P,), dtype=jnp.float32),
           0.1 * jax.random.normal(kb1, (P,), dtype=jnp.float32),
           0.1 * jax.random.normal(km1, (P,), dtype=jnp.float32),
           1.0 + 0.1 * jnp.abs(jax.random.normal(kv1, (P,), dtype=jnp.float32)))
    bn2 = (1.0 + 0.1 * jax.random.normal(kg2, (P,), dtype=jnp.float32),
           0.1 * jax.random.normal(kb2, (P,), dtype=jnp.float32),
           0.1 * jax.random.normal(km2, (P,), dtype=jnp.float32),
           1.0 + 0.1 * jnp.abs(jax.random.normal(kv2, (P,), dtype=jnp.float32)))

    out = jax.block_until_ready(snn_basic_block(x, w1, w2, bn1, bn2))
    ref = jax.block_until_ready(reference_block(x, w1, w2, bn1, bn2))

    # Tolerance widened slightly vs the pure-f32 version: the kernel feeds the
    # MXU bf16 operands (with f32 accumulation), per the perf review.
    np.testing.assert_allclose(np.asarray(out), np.asarray(ref), atol=5e-2, rtol=5e-2)

    print("KERNEL_OK")
</pallas_src>

<mosaic_0001>
module attributes {stable_mosaic.version = 11 : i64} {
  func.func @basic_block_kernel(%arg0: i32, %arg1: memref<32x128xf32, #tpu.memory_space<vmem>>, %arg2: memref<3x128x128xbf16, #tpu.memory_space<vmem>>, %arg3: memref<3x128x128xbf16, #tpu.memory_space<vmem>>, %arg4: memref<1x128xf32, #tpu.memory_space<vmem>>, %arg5: memref<1x128xf32, #tpu.memory_space<vmem>>, %arg6: memref<1x128xf32, #tpu.memory_space<vmem>>, %arg7: memref<1x128xf32, #tpu.memory_space<vmem>>, %arg8: memref<32x128xf32, #tpu.memory_space<vmem>>) attributes {dimension_semantics = [#tpu.dimension_semantics<parallel>], iteration_bounds = array<i64: 1>, scalar_prefetch = 0 : i64, scratch_operands = 0 : i64, tpu.core_type = #tpu.core_type<tc>, window_params = [{transform_indices = @transform_0, window_bounds = array<i64: 32, 128>}, {pipeline_mode = #tpu.pipeline_mode<synchronous>, transform_indices = @transform_1, window_bounds = array<i64: 3, 128, 128>}, {pipeline_mode = #tpu.pipeline_mode<synchronous>, transform_indices = @transform_2, window_bounds = array<i64: 3, 128, 128>}, {pipeline_mode = #tpu.pipeline_mode<synchronous>, transform_indices = @transform_3, window_bounds = array<i64: 1, 128>}, {pipeline_mode = #tpu.pipeline_mode<synchronous>, transform_indices = @transform_4, window_bounds = array<i64: 1, 128>}, {pipeline_mode = #tpu.pipeline_mode<synchronous>, transform_indices = @transform_5, window_bounds = array<i64: 1, 128>}, {pipeline_mode = #tpu.pipeline_mode<synchronous>, transform_indices = @transform_6, window_bounds = array<i64: 1, 128>}, {transform_indices = @transform_7, window_bounds = array<i64: 32, 128>}]} {
    %c0 = arith.constant 0 : index
    %c0_0 = arith.constant 0 : index
    %0 = vector.load %arg1[%c0, %c0_0] : memref<32x128xf32, #tpu.memory_space<vmem>>, vector<32x128xf32>
    %1 = tpu.iota {dimensions = array<i32: 0>} : vector<32x1xi32>
    %c16_i32 = arith.constant 16 : i32
    %c0_i32 = arith.constant 0 : i32
    %2 = arith.cmpi eq, %c16_i32, %c0_i32 : i32
    %c1_i32 = arith.constant 1 : i32
    %3 = arith.select %2, %c1_i32, %c16_i32 : i32
    %4 = vector.broadcast %3 : i32 to vector<32x1xi32>
    %5 = arith.remsi %1, %4 : vector<32x1xi32>
    %c0_i32_1 = arith.constant 0 : i32
    %6 = vector.broadcast %c0_i32_1 : i32 to vector<32x1xi32>
    %7 = arith.cmpi ne, %5, %6 : vector<32x1xi32>
    %c0_i32_2 = arith.constant 0 : i32
    %8 = vector.broadcast %c0_i32_2 : i32 to vector<32x1xi32>
    %9 = arith.cmpi slt, %5, %8 : vector<32x1xi32>
    %c0_i32_3 = arith.constant 0 : i32
    %10 = arith.cmpi slt, %3, %c0_i32_3 : i32
    %11 = vector.broadcast %10 : i1 to vector<32x1xi1>
    %12 = vector.broadcast %11 : vector<32x1xi1> to vector<32x1xi1>
    %13 = arith.xori %9, %12 : vector<32x1xi1>
    %14 = arith.andi %13, %7 : vector<32x1xi1>
    %15 = vector.broadcast %3 : i32 to vector<32x1xi32>
    %16 = arith.addi %5, %15 : vector<32x1xi32>
    %17 = arith.select %14, %16, %5 : vector<32x1xi1>, vector<32x1xi32>
    %18 = arith.truncf %0 : vector<32x128xf32> to vector<32x128xbf16>
    %c1 = arith.constant 1 : index
    %c0_4 = arith.constant 0 : index
    %c0_5 = arith.constant 0 : index
    %19 = vector.load %arg2[%c1, %c0_4, %c0_5] : memref<3x128x128xbf16, #tpu.memory_space<vmem>>, vector<1x128x128xbf16>
    %20 = vector.shape_cast %19 : vector<1x128x128xbf16> to vector<128x128xbf16>
    %cst = arith.constant dense<0.000000e+00> : vector<32x128xf32>
    %21 = tpu.matmul %18, %20, %cst {dimension_numbers = #tpu.dot_dimension_numbers<[1], [0], [0], [1], [0, 0, 1, 1], [], []>} : vector<32x128xbf16>, vector<128x128xbf16>, vector<32x128xf32> -> vector<32x128xf32>
    %c1_i32_6 = arith.constant 1 : i32
    %22 = tpu.dynamic_rotate %0 by %c1_i32_6 dim 0 : vector<32x128xf32>, i32 -> vector<32x128xf32>
    %c-1_i32 = arith.constant -1 : i32
    %23 = vector.broadcast %c-1_i32 : i32 to vector<32x1xi32>
    %24 = arith.addi %17, %23 : vector<32x1xi32>
    %c0_i32_7 = arith.constant 0 : i32
    %25 = vector.broadcast %c0_i32_7 : i32 to vector<32x1xi32>
    %26 = arith.cmpi sge, %24, %25 : vector<32x1xi32>
    %c-1_i32_8 = arith.constant -1 : i32
    %27 = vector.broadcast %c-1_i32_8 : i32 to vector<32x1xi32>
    %28 = arith.addi %17, %27 : vector<32x1xi32>
    %c16_i32_9 = arith.constant 16 : i32
    %29 = vector.broadcast %c16_i32_9 : i32 to vector<32x1xi32>
    %30 = arith.cmpi slt, %28, %29 : vector<32x1xi32>
    %31 = arith.andi %26, %30 : vector<32x1xi1>
    %cst_10 = arith.constant 0.000000e+00 : f32
    %32 = vector.shape_cast %31 : vector<32x1xi1> to vector<32x1xi1>
    %33 = vector.broadcast %32 : vector<32x1xi1> to vector<32x128xi1>
    %34 = vector.broadcast %cst_10 : f32 to vector<32x128xf32>
    %35 = arith.select %33, %22, %34 : vector<32x128xi1>, vector<32x128xf32>
    %36 = arith.truncf %35 : vector<32x128xf32> to vector<32x128xbf16>
    %c0_11 = arith.constant 0 : index
    %c0_12 = arith.constant 0 : index
    %c0_13 = arith.constant 0 : index
    %37 = vector.load %arg2[%c0_11, %c0_12, %c0_13] : memref<3x128x128xbf16, #tpu.memory_space<vmem>>, vector<1x128x128xbf16>
    %38 = vector.shape_cast %37 : vector<1x128x128xbf16> to vector<128x128xbf16>
    %cst_14 = arith.constant dense<0.000000e+00> : vector<32x128xf32>
    %39 = tpu.matmul %36, %38, %cst_14 {dimension_numbers = #tpu.dot_dimension_numbers<[1], [0], [0], [1], [0, 0, 1, 1], [], []>} : vector<32x128xbf16>, vector<128x128xbf16>, vector<32x128xf32> -> vector<32x128xf32>
    %40 = arith.addf %21, %39 : vector<32x128xf32>
    %c31_i32 = arith.constant 31 : i32
    %41 = tpu.dynamic_rotate %0 by %c31_i32 dim 0 : vector<32x128xf32>, i32 -> vector<32x128xf32>
    %c1_i32_15 = arith.constant 1 : i32
    %42 = vector.broadcast %c1_i32_15 : i32 to vector<32x1xi32>
    %43 = arith.addi %17, %42 : vector<32x1xi32>
    %c0_i32_16 = arith.constant 0 : i32
    %44 = vector.broadcast %c0_i32_16 : i32 to vector<32x1xi32>
    %45 = arith.cmpi sge, %43, %44 : vector<32x1xi32>
    %c1_i32_17 = arith.constant 1 : i32
    %46 = vector.broadcast %c1_i32_17 : i32 to vector<32x1xi32>
    %47 = arith.addi %17, %46 : vector<32x1xi32>
    %c16_i32_18 = arith.constant 16 : i32
    %48 = vector.broadcast %c16_i32_18 : i32 to vector<32x1xi32>
    %49 = arith.cmpi slt, %47, %48 : vector<32x1xi32>
    %50 = arith.andi %45, %49 : vector<32x1xi1>
    %cst_19 = arith.constant 0.000000e+00 : f32
    %51 = vector.shape_cast %50 : vector<32x1xi1> to vector<32x1xi1>
    %52 = vector.broadcast %51 : vector<32x1xi1> to vector<32x128xi1>
    %53 = vector.broadcast %cst_19 : f32 to vector<32x128xf32>
    %54 = arith.select %52, %41, %53 : vector<32x128xi1>, vector<32x128xf32>
    %55 = arith.truncf %54 : vector<32x128xf32> to vector<32x128xbf16>
    %c2 = arith.constant 2 : index
    %c0_20 = arith.constant 0 : index
    %c0_21 = arith.constant 0 : index
    %56 = vector.load %arg2[%c2, %c0_20, %c0_21] : memref<3x128x128xbf16, #tpu.memory_space<vmem>>, vector<1x128x128xbf16>
    %57 = vector.shape_cast %56 : vector<1x128x128xbf16> to vector<128x128xbf16>
    %cst_22 = arith.constant dense<0.000000e+00> : vector<32x128xf32>
    %58 = tpu.matmul %55, %57, %cst_22 {dimension_numbers = #tpu.dot_dimension_numbers<[1], [0], [0], [1], [0, 0, 1, 1], [], []>} : vector<32x128xbf16>, vector<128x128xbf16>, vector<32x128xf32> -> vector<32x128xf32>
    %59 = arith.addf %40, %58 : vector<32x128xf32>
    %c0_23 = arith.constant 0 : index
    %c0_24 = arith.constant 0 : index
    %60 = vector.load %arg4[%c0_23, %c0_24] : memref<1x128xf32, #tpu.memory_space<vmem>>, vector<1x128xf32>
    %61 = vector.broadcast %60 : vector<1x128xf32> to vector<32x128xf32>
    %62 = arith.mulf %59, %61 : vector<32x128xf32>
    %c0_25 = arith.constant 0 : index
    %c0_26 = arith.constant 0 : index
    %63 = vector.load %arg5[%c0_25, %c0_26] : memref<1x128xf32, #tpu.memory_space<vmem>>, vector<1x128xf32>
    %64 = vector.broadcast %63 : vector<1x128xf32> to vector<32x128xf32>
    %65 = arith.addf %62, %64 : vector<32x128xf32>
    %cst_27 = arith.constant 0.000000e+00 : f32
    %66 = vector.broadcast %cst_27 : f32 to vector<32x128xf32>
    %67 = arith.maximumf %65, %66 : vector<32x128xf32>
    %68 = arith.truncf %67 : vector<32x128xf32> to vector<32x128xbf16>
    %c1_28 = arith.constant 1 : index
    %c0_29 = arith.constant 0 : index
    %c0_30 = arith.constant 0 : index
    %69 = vector.load %arg3[%c1_28, %c0_29, %c0_30] : memref<3x128x128xbf16, #tpu.memory_space<vmem>>, vector<1x128x128xbf16>
    %70 = vector.shape_cast %69 : vector<1x128x128xbf16> to vector<128x128xbf16>
    %cst_31 = arith.constant dense<0.000000e+00> : vector<32x128xf32>
    %71 = tpu.matmul %68, %70, %cst_31 {dimension_numbers = #tpu.dot_dimension_numbers<[1], [0], [0], [1], [0, 0, 1, 1], [], []>} : vector<32x128xbf16>, vector<128x128xbf16>, vector<32x128xf32> -> vector<32x128xf32>
    %c1_i32_32 = arith.constant 1 : i32
    %72 = tpu.dynamic_rotate %67 by %c1_i32_32 dim 0 : vector<32x128xf32>, i32 -> vector<32x128xf32>
    %c-1_i32_33 = arith.constant -1 : i32
    %73 = vector.broadcast %c-1_i32_33 : i32 to vector<32x1xi32>
    %74 = arith.addi %17, %73 : vector<32x1xi32>
    %c0_i32_34 = arith.constant 0 : i32
    %75 = vector.broadcast %c0_i32_34 : i32 to vector<32x1xi32>
    %76 = arith.cmpi sge, %74, %75 : vector<32x1xi32>
    %c-1_i32_35 = arith.constant -1 : i32
    %77 = vector.broadcast %c-1_i32_35 : i32 to vector<32x1xi32>
    %78 = arith.addi %17, %77 : vector<32x1xi32>
    %c16_i32_36 = arith.constant 16 : i32
    %79 = vector.broadcast %c16_i32_36 : i32 to vector<32x1xi32>
    %80 = arith.cmpi slt, %78, %79 : vector<32x1xi32>
    %81 = arith.andi %76, %80 : vector<32x1xi1>
    %cst_37 = arith.constant 0.000000e+00 : f32
    %82 = vector.shape_cast %81 : vector<32x1xi1> to vector<32x1xi1>
    %83 = vector.broadcast %82 : vector<32x1xi1> to vector<32x128xi1>
    %84 = vector.broadcast %cst_37 : f32 to vector<32x128xf32>
    %85 = arith.select %83, %72, %84 : vector<32x128xi1>, vector<32x128xf32>
    %86 = arith.truncf %85 : vector<32x128xf32> to vector<32x128xbf16>
    %c0_38 = arith.constant 0 : index
    %c0_39 = arith.constant 0 : index
    %c0_40 = arith.constant 0 : index
    %87 = vector.load %arg3[%c0_38, %c0_39, %c0_40] : memref<3x128x128xbf16, #tpu.memory_space<vmem>>, vector<1x128x128xbf16>
    %88 = vector.shape_cast %87 : vector<1x128x128xbf16> to vector<128x128xbf16>
    %cst_41 = arith.constant dense<0.000000e+00> : vector<32x128xf32>
    %89 = tpu.matmul %86, %88, %cst_41 {dimension_numbers = #tpu.dot_dimension_numbers<[1], [0], [0], [1], [0, 0, 1, 1], [], []>} : vector<32x128xbf16>, vector<128x128xbf16>, vector<32x128xf32> -> vector<32x128xf32>
    %90 = arith.addf %71, %89 : vector<32x128xf32>
    %c31_i32_42 = arith.constant 31 : i32
    %91 = tpu.dynamic_rotate %67 by %c31_i32_42 dim 0 : vector<32x128xf32>, i32 -> vector<32x128xf32>
    %c1_i32_43 = arith.constant 1 : i32
    %92 = vector.broadcast %c1_i32_43 : i32 to vector<32x1xi32>
    %93 = arith.addi %17, %92 : vector<32x1xi32>
    %c0_i32_44 = arith.constant 0 : i32
    %94 = vector.broadcast %c0_i32_44 : i32 to vector<32x1xi32>
    %95 = arith.cmpi sge, %93, %94 : vector<32x1xi32>
    %c1_i32_45 = arith.constant 1 : i32
    %96 = vector.broadcast %c1_i32_45 : i32 to vector<32x1xi32>
    %97 = arith.addi %17, %96 : vector<32x1xi32>
    %c16_i32_46 = arith.constant 16 : i32
    %98 = vector.broadcast %c16_i32_46 : i32 to vector<32x1xi32>
    %99 = arith.cmpi slt, %97, %98 : vector<32x1xi32>
    %100 = arith.andi %95, %99 : vector<32x1xi1>
    %cst_47 = arith.constant 0.000000e+00 : f32
    %101 = vector.shape_cast %100 : vector<32x1xi1> to vector<32x1xi1>
    %102 = vector.broadcast %101 : vector<32x1xi1> to vector<32x128xi1>
    %103 = vector.broadcast %cst_47 : f32 to vector<32x128xf32>
    %104 = arith.select %102, %91, %103 : vector<32x128xi1>, vector<32x128xf32>
    %105 = arith.truncf %104 : vector<32x128xf32> to vector<32x128xbf16>
    %c2_48 = arith.constant 2 : index
    %c0_49 = arith.constant 0 : index
    %c0_50 = arith.constant 0 : index
    %106 = vector.load %arg3[%c2_48, %c0_49, %c0_50] : memref<3x128x128xbf16, #tpu.memory_space<vmem>>, vector<1x128x128xbf16>
    %107 = vector.shape_cast %106 : vector<1x128x128xbf16> to vector<128x128xbf16>
    %cst_51 = arith.constant dense<0.000000e+00> : vector<32x128xf32>
    %108 = tpu.matmul %105, %107, %cst_51 {dimension_numbers = #tpu.dot_dimension_numbers<[1], [0], [0], [1], [0, 0, 1, 1], [], []>} : vector<32x128xbf16>, vector<128x128xbf16>, vector<32x128xf32> -> vector<32x128xf32>
    %109 = arith.addf %90, %108 : vector<32x128xf32>
    %c0_52 = arith.constant 0 : index
    %c0_53 = arith.constant 0 : index
    %110 = vector.load %arg6[%c0_52, %c0_53] : memref<1x128xf32, #tpu.memory_space<vmem>>, vector<1x128xf32>
    %111 = vector.broadcast %110 : vector<1x128xf32> to vector<32x128xf32>
    %112 = arith.mulf %109, %111 : vector<32x128xf32>
    %c0_54 = arith.constant 0 : index
    %c0_55 = arith.constant 0 : index
    %113 = vector.load %arg7[%c0_54, %c0_55] : memref<1x128xf32, #tpu.memory_space<vmem>>, vector<1x128xf32>
    %114 = vector.broadcast %113 : vector<1x128xf32> to vector<32x128xf32>
    %115 = arith.addf %112, %114 : vector<32x128xf32>
    %116 = arith.addf %115, %0 : vector<32x128xf32>
    %cst_56 = arith.constant 0.000000e+00 : f32
    %117 = vector.broadcast %cst_56 : f32 to vector<32x128xf32>
    %118 = arith.maximumf %116, %117 : vector<32x128xf32>
    %c0_57 = arith.constant 0 : index
    %c0_58 = arith.constant 0 : index
    %119 = vector.load %arg8[%c0_57, %c0_58] : memref<32x128xf32, #tpu.memory_space<vmem>>, vector<32x128xf32>
    tpu.vector_store %arg8[%c0_57, %c0_58], %118 {strides = array<i32>} : memref<32x128xf32, #tpu.memory_space<vmem>>, vector<32x128xf32>,
    return
  }
  func.func @transform_0(%arg0: i32) -> (i32, i32) {
    %c0_i32 = arith.constant 0 : i32
    %c0_i32_0 = arith.constant 0 : i32
    return %arg0, %c0_i32 : i32, i32
  }
  func.func @transform_1(%arg0: i32) -> (i32, i32, i32) {
    %c0_i32 = arith.constant 0 : i32
    %c0_i32_0 = arith.constant 0 : i32
    %c0_i32_1 = arith.constant 0 : i32
    %c0_i32_2 = arith.constant 0 : i32
    return %c0_i32, %c0_i32_0, %c0_i32_1 : i32, i32, i32
  }
  func.func @transform_2(%arg0: i32) -> (i32, i32, i32) {
    %c0_i32 = arith.constant 0 : i32
    %c0_i32_0 = arith.constant 0 : i32
    %c0_i32_1 = arith.constant 0 : i32
    %c0_i32_2 = arith.constant 0 : i32
    return %c0_i32, %c0_i32_0, %c0_i32_1 : i32, i32, i32
  }
  func.func @transform_3(%arg0: i32) -> (i32, i32) {
    %c0_i32 = arith.constant 0 : i32
    %c0_i32_0 = arith.constant 0 : i32
    %c0_i32_1 = arith.constant 0 : i32
    return %c0_i32, %c0_i32_0 : i32, i32
  }
  func.func @transform_4(%arg0: i32) -> (i32, i32) {
    %c0_i32 = arith.constant 0 : i32
    %c0_i32_0 = arith.constant 0 : i32
    %c0_i32_1 = arith.constant 0 : i32
    return %c0_i32, %c0_i32_0 : i32, i32
  }
  func.func @transform_5(%arg0: i32) -> (i32, i32) {
    %c0_i32 = arith.constant 0 : i32
    %c0_i32_0 = arith.constant 0 : i32
    %c0_i32_1 = arith.constant 0 : i32
    return %c0_i32, %c0_i32_0 : i32, i32
  }
  func.func @transform_6(%arg0: i32) -> (i32, i32) {
    %c0_i32 = arith.constant 0 : i32
    %c0_i32_0 = arith.constant 0 : i32
    %c0_i32_1 = arith.constant 0 : i32
    return %c0_i32, %c0_i32_0 : i32, i32
  }
  func.func @transform_7(%arg0: i32) -> (i32, i32) {
    %c0_i32 = arith.constant 0 : i32
    %c0_i32_0 = arith.constant 0 : i32
    return %arg0, %c0_i32 : i32, i32
  }
}

</mosaic_0001>

<llo_original>
// kernel: tpu_custom_call.1
$region0: #{tpu_custom_call.1}
  #allocation0 [shape = 'u32[]', space=smem, size = 0x4, offset = 0x4, fixed_abs, tag = 'smem constant byte address 0x4 - core index']
  #allocation1 [shape = 'u32[144,128]{1,0:T(1,128)}', space=vmem, size = 0x12000, scoped, tag = 'internal scratch']
  %s0 = inlined_call_operand.hbm [shape: f32[32,128], index: 0, kind: input, shape index: {}]
  %s1 = inlined_call_operand.hbm [shape: bf16[3,128,128], index: 1, kind: input, shape index: {}]
  %s2 = inlined_call_operand.hbm [shape: bf16[3,128,128], index: 2, kind: input, shape index: {}]
  %s3 = inlined_call_operand.vmem [shape: f32[1,128], index: 3, kind: input, shape index: {}]
  %s4 = inlined_call_operand.vmem [shape: f32[1,128], index: 4, kind: input, shape index: {}]
  %s5 = inlined_call_operand.vmem [shape: f32[1,128], index: 5, kind: input, shape index: {}]
  %s6 = inlined_call_operand.vmem [shape: f32[1,128], index: 6, kind: input, shape index: {}]
  %s7 = inlined_call_operand.hbm [shape: f32[32,128], index: 7, kind: output, shape index: {}]
  %s8 = sld [smem:[#allocation0]]
  $region50: #{tpu_custom_call.1} parent=0
    _
  %s10 = ssub.s32 1, %s8
  %s11 = scalar_select 0, %s10, %s8
  $region1: #{tpu_custom_call.1} parent=0
    #allocation2 [shape = 'u8[16384]{0}', space=vmem, size = 0x4000, scoped, tag = 'input window, operand 0, single buffered']
    #allocation3 [shape = 's32[1]{0}', space=sflag, size = 0x4, scoped, tag = 'scoped memory for tpu_custom_call.1']
    #allocation4 [shape = 's32[1]{0}', space=sflag, size = 0x4, scoped, tag = 'scoped memory for tpu_custom_call.1']
    #allocation5 [shape = 'u8[98304]{0}', space=vmem, size = 0x18000, scoped, tag = 'input window, operand 1, single buffered']
    #allocation6 [shape = 's32[1]{0}', space=sflag, size = 0x4, scoped, tag = 'scoped memory for tpu_custom_call.1']
    #allocation7 [shape = 'u8[98304]{0}', space=vmem, size = 0x18000, scoped, tag = 'input window, operand 2, single buffered']
    #allocation8 [shape = 'u8[16384]{0}', space=vmem, size = 0x4000, scoped, tag = 'output window, operand 0, single buffered']
    %12 = vsyncpa [#allocation3], 0
    %13 = vsyncpa [#allocation6], 0
    %14 = vsyncpa [#allocation4], 0
    // Predicated region
    $region2: #{tpu_custom_call.1} parent=1 // pred_check
      _
    $region3: #{tpu_custom_call.1} parent=1 // pred_check_branch
      %16 = sbr.rel (0) target = $region5
    $region4: #{tpu_custom_call.1} parent=1 // pred_region
      %s18 = ssub.s32 512, 512
      %19 = vsyncadd [#allocation3], %s18
      %s20 = sshll.u32 [#allocation2], 4
      %s21 = int_to_ptr.vmem [resolvable:$true] %s20
      %26 = dma.hbm_to_vmem [thread:$0]  %s0, 512, %s21, [#allocation3], 128, 128, 8
    $region5: #{tpu_custom_call.1} parent=1 // pred_fallthru
      _
    // Predicated region
    $region6: #{tpu_custom_call.1} parent=1 // pred_check
      _
    $region7: #{tpu_custom_call.1} parent=1 // pred_check_branch
      %28 = sbr.rel (0) target = $region9
    $region8: #{tpu_custom_call.1} parent=1 // pred_region
      %s30 = ssub.s32 3072, 3072
      %31 = vsyncadd [#allocation6], %s30
      %s32 = sshll.u32 [#allocation5], 4
      %s33 = int_to_ptr.vmem [resolvable:$true] %s32
      %38 = dma.hbm_to_vmem [thread:$0]  %s1, 3072, %s33, [#allocation6], 64, 64, 4
    $region9: #{tpu_custom_call.1} parent=1 // pred_fallthru
      _
    // Predicated region
    $region10: #{tpu_custom_call.1} parent=1 // pred_check
      _
    $region11: #{tpu_custom_call.1} parent=1 // pred_check_branch
      %40 = sbr.rel (0) target = $region13
    $region12: #{tpu_custom_call.1} parent=1 // pred_region
      %s42 = ssub.s32 3072, 3072
      %43 = vsyncadd [#allocation6], %s42
      %s44 = sshll.u32 [#allocation7], 4
      %s45 = int_to_ptr.vmem [resolvable:$true] %s44
      %50 = dma.hbm_to_vmem [thread:$0]  %s2, 3072, %s45, [#allocation6], 64, 64, 4
    $region13: #{tpu_custom_call.1} parent=1 // pred_fallthru
      _
    // Predicated region
    $region14: #{tpu_custom_call.1} parent=1 // pred_check
      _
    $region15: #{tpu_custom_call.1} parent=1 // pred_check_branch
      %52 = sbr.rel (0) target = $region17
    $region16: #{tpu_custom_call.1} parent=1 // pred_region
      _
    $region17: #{tpu_custom_call.1} parent=1 // pred_fallthru
      _
    // Predicated region
    $region18: #{tpu_custom_call.1} parent=1 // pred_check
      _
    $region19: #{tpu_custom_call.1} parent=1 // pred_check_branch
      %54 = sbr.rel (0) target = $region21
    $region20: #{tpu_custom_call.1} parent=1 // pred_region
      _
    $region21: #{tpu_custom_call.1} parent=1 // pred_fallthru
      _
    // Predicated region
    $region22: #{tpu_custom_call.1} parent=1 // pred_check
      _
    $region23: #{tpu_custom_call.1} parent=1 // pred_check_branch
      %56 = sbr.rel (0) target = $region25
    $region24: #{tpu_custom_call.1} parent=1 // pred_region
      _
    $region25: #{tpu_custom_call.1} parent=1 // pred_fallthru
      _
    // Predicated region
    $region26: #{tpu_custom_call.1} parent=1 // pred_check
      _
    $region27: #{tpu_custom_call.1} parent=1 // pred_check_branch
      %58 = sbr.rel (0) target = $region29
    $region28: #{tpu_custom_call.1} parent=1 // pred_region
      _
    $region29: #{tpu_custom_call.1} parent=1 // pred_fallthru
      _
    // Predicated region
    $region30: #{tpu_custom_call.1} parent=1 // pred_check
      _
    $region31: #{tpu_custom_call.1} parent=1 // pred_check_branch
      %60 = sbr.rel (0) target = $region33
    $region32: #{tpu_custom_call.1} parent=1 // pred_region
      %61 = dma.done [#allocation3], 512
    $region33: #{tpu_custom_call.1} parent=1 // pred_fallthru
      _
    // Predicated region
    $region34: #{tpu_custom_call.1} parent=1 // pred_check
      _
    $region35: #{tpu_custom_call.1} parent=1 // pred_check_branch
      %63 = sbr.rel (0) target = $region37
    $region36: #{tpu_custom_call.1} parent=1 // pred_region
      %64 = dma.done [#allocation6], 3072
    $region37: #{tpu_custom_call.1} parent=1 // pred_fallthru
      _
    // Predicated region
    $region38: #{tpu_custom_call.1} parent=1 // pred_check
      _
    $region39: #{tpu_custom_call.1} parent=1 // pred_check_branch
      %66 = sbr.rel (0) target = $region41
    $region40: #{tpu_custom_call.1} parent=1 // pred_region
      %67 = dma.done [#allocation6], 3072
    $region41: #{tpu_custom_call.1} parent=1 // pred_fallthru
      _
    %v69 = vld [vmem:[#allocation2] sm:$0xff]
    %v70 = vld [vmem:[#allocation2 + $0x8] sm:$0xff]
    %v71 = vld [vmem:[#allocation2 + $0x10] sm:$0xff]
    %v72 = vld [vmem:[#allocation2 + $0x18] sm:$0xff]
    %v73 = vlaneseq
    %v74 = vshrl.u32 %v73, 7
    %v75 = vadd.s32 %v74, 8
    %v76 = vadd.s32 %v74, 16
    %v77 = vadd.s32 %v74, 24
    %vm78 = vcmp.lt.s32.totalorder %v74, 0
    %v79 = vsub.s32 0, %v74
    %v80 = vsel %vm78, %v79, %v74
    %v81 = vshrl.u32 %v80, 4
    %v82 = vand.u32 %v80, 15
    %v83 = vsub.s32 0, %v82
    %v84 = vsel %vm78, %v83, %v82
    %vm85 = vcmp.lt.s32.totalorder %v75, 0
    %v86 = vsub.s32 0, %v75
    %v87 = vsel %vm85, %v86, %v75
    %v88 = vshrl.u32 %v87, 4
    %v89 = vand.u32 %v87, 15
    %v90 = vsub.s32 0, %v89
    %v91 = vsel %vm85, %v90, %v89
    %vm92 = vcmp.lt.s32.totalorder %v76, 0
    %v93 = vsub.s32 0, %v76
    %v94 = vsel %vm92, %v93, %v76
    %v95 = vshrl.u32 %v94, 4
    %v96 = vand.u32 %v94, 15
    %v97 = vsub.s32 0, %v96
    %v98 = vsel %vm92, %v97, %v96
    %vm99 = vcmp.lt.s32.totalorder %v77, 0
    %v100 = vsub.s32 0, %v77
    %v101 = vsel %vm99, %v100, %v77
    %v102 = vshrl.u32 %v101, 4
    %v103 = vand.u32 %v101, 15
    %v104 = vsub.s32 0, %v103
    %v105 = vsel %vm99, %v104, %v103
    %vm106 = vcmp.ne.s32.totalorder %v84, 0
    %vm107 = vcmp.ne.s32.totalorder %v91, 0
    %vm108 = vcmp.ne.s32.totalorder %v98, 0
    %vm109 = vcmp.ne.s32.totalorder %v105, 0
    %vm110 = vcmp.lt.s32.totalorder %v84, 0
    %vm111 = vcmp.lt.s32.totalorder %v91, 0
    %vm112 = vcmp.lt.s32.totalorder %v98, 0
    %vm113 = vcmp.lt.s32.totalorder %v105, 0
    %vm114 = vmand %vm110, %vm106
    %vm115 = vmand %vm111, %vm107
    %vm116 = vmand %vm112, %vm108
    %vm117 = vmand %vm113, %vm109
    %v118 = vadd.s32 %v84, 16
    %v119 = vadd.s32 %v91, 16
    %v120 = vadd.s32 %v98, 16
    %v121 = vadd.s32 %v105, 16
    %v122 = vsel %vm114, %v118, %v84
    %v123 = vsel %vm115, %v119, %v91
    %v124 = vsel %vm116, %v120, %v98
    %v125 = vsel %vm117, %v121, %v105
    %v126 = vpack.c.bf16 %v70, %v69
    %v127 = vpack.c.bf16 %v72, %v71
    %s128 = scalar_lea.vmem [#allocation5], 64
    %v129 = vld [vmem:[%s128] sm:$0xf]
    %v130 = vld [vmem:[%s128 + $0x4] sm:$0xf]
    %v131 = vld [vmem:[%s128 + $0x8] sm:$0xf]
    %v132 = vld [vmem:[%s128 + $0xc] sm:$0xf]
    %v133 = vld [vmem:[%s128 + $0x10] sm:$0xf]
    %v134 = vld [vmem:[%s128 + $0x14] sm:$0xf]
    %v135 = vld [vmem:[%s128 + $0x18] sm:$0xf]
    %v136 = vld [vmem:[%s128 + $0x1c] sm:$0xf]
    %v137 = vld [vmem:[%s128 + $0x20] sm:$0xf]
    %v138 = vld [vmem:[%s128 + $0x24] sm:$0xf]
    %v139 = vld [vmem:[%s128 + $0x28] sm:$0xf]
    %v140 = vld [vmem:[%s128 + $0x2c] sm:$0xf]
    %v141 = vld [vmem:[%s128 + $0x30] sm:$0xf]
    %v142 = vld [vmem:[%s128 + $0x34] sm:$0xf]
    %v143 = vld [vmem:[%s128 + $0x38] sm:$0xf]
    %v144 = vld [vmem:[%s128 + $0x3c] sm:$0xf]
    %v145 = vrot.slane %v69, 7
    %v146 = vrot.slane %v70, 7
    %v147 = vrot.slane %v71, 7
    %v148 = vrot.slane %v72, 7
    %vm149 = vcmp.lt.s32.totalorder %v74, 1
    %v150 = vsel %vm149, %v147, %v148
    %v151 = vsel %vm149, %v146, %v147
    %v152 = vsel %vm149, %v145, %v146
    %v153 = vsel %vm149, %v148, %v145
    %v154 = vadd.s32 %v122, 4294967295
    %v155 = vadd.s32 %v123, 4294967295
    %v156 = vadd.s32 %v124, 4294967295
    %v157 = vadd.s32 %v125, 4294967295
    %vm158 = vcmp.ge.s32.totalorder %v154, 0
    %vm159 = vcmp.ge.s32.totalorder %v155, 0
    %vm160 = vcmp.ge.s32.totalorder %v156, 0
    %vm161 = vcmp.ge.s32.totalorder %v157, 0
    %vm162 = vcmp.lt.s32.totalorder %v154, 16
    %vm163 = vcmp.lt.s32.totalorder %v155, 16
    %vm164 = vcmp.lt.s32.totalorder %v156, 16
    %vm165 = vcmp.lt.s32.totalorder %v157, 16
    %vm166 = vmand %vm158, %vm162
    %vm167 = vmand %vm159, %vm163
    %vm168 = vmand %vm160, %vm164
    %vm169 = vmand %vm161, %vm165
    %v170 = vsel %vm166, 1, 0
    %v171 = vsel %vm167, 1, 0
    %v172 = vsel %vm168, 1, 0
    %v173 = vsel %vm169, 1, 0
    %vm174 = vcmp.eq.s32.totalorder %v170, 1
    %vm175 = vcmp.eq.s32.totalorder %v171, 1
    %vm176 = vcmp.eq.s32.totalorder %v172, 1
    %vm177 = vcmp.eq.s32.totalorder %v173, 1
    %v178 = vsel %vm174, %v153, 0.0
    %v179 = vsel %vm175, %v152, 0.0
    %v180 = vsel %vm176, %v151, 0.0
    %v181 = vsel %vm177, %v150, 0.0
    %v182 = vpack.c.bf16 %v179, %v178
    %v183 = vpack.c.bf16 %v181, %v180
    %v184 = vld [vmem:[#allocation5] sm:$0xf]
    %v185 = vld [vmem:[#allocation5 + $0x4] sm:$0xf]
    %v186 = vld [vmem:[#allocation5 + $0x8] sm:$0xf]
    %v187 = vld [vmem:[#allocation5 + $0xc] sm:$0xf]
    %v188 = vld [vmem:[#allocation5 + $0x10] sm:$0xf]
    %v189 = vld [vmem:[#allocation5 + $0x14] sm:$0xf]
    %v190 = vld [vmem:[#allocation5 + $0x18] sm:$0xf]
    %v191 = vld [vmem:[#allocation5 + $0x1c] sm:$0xf]
    %v192 = vld [vmem:[#allocation5 + $0x20] sm:$0xf]
    %v193 = vld [vmem:[#allocation5 + $0x24] sm:$0xf]
    %v194 = vld [vmem:[#allocation5 + $0x28] sm:$0xf]
    %v195 = vld [vmem:[#allocation5 + $0x2c] sm:$0xf]
    %v196 = vld [vmem:[#allocation5 + $0x30] sm:$0xf]
    %v197 = vld [vmem:[#allocation5 + $0x34] sm:$0xf]
    %v198 = vld [vmem:[#allocation5 + $0x38] sm:$0xf]
    %v199 = vld [vmem:[#allocation5 + $0x3c] sm:$0xf]
    %v216 = vunpack.c.l.b16 %v184
    %v217 = vunpack.c.l.b16 %v185
    %v218 = vunpack.c.l.b16 %v186
    %v219 = vunpack.c.l.b16 %v187
    %v220 = vunpack.c.l.b16 %v188
    %v221 = vunpack.c.l.b16 %v189
    %v222 = vunpack.c.l.b16 %v190
    %v223 = vunpack.c.l.b16 %v191
    %v224 = vunpack.c.l.b16 %v192
    %v225 = vunpack.c.l.b16 %v193
    %v226 = vunpack.c.l.b16 %v194
    %v227 = vunpack.c.l.b16 %v195
    %v228 = vunpack.c.l.b16 %v196
    %v229 = vunpack.c.l.b16 %v197
    %v230 = vunpack.c.l.b16 %v198
    %v231 = vunpack.c.l.b16 %v199
    %v232 = vpack.c.b16 %v217, %v216
    %v233 = vpack.c.b16 %v219, %v218
    %v234 = vpack.c.b16 %v221, %v220
    %v235 = vpack.c.b16 %v223, %v222
    %v236 = vpack.c.b16 %v225, %v224
    %v237 = vpack.c.b16 %v227, %v226
    %v238 = vpack.c.b16 %v229, %v228
    %v239 = vpack.c.b16 %v231, %v230
    %248 = vmatprep.subr.bf16.mxu0 0
    %249 = vmatpush1.bf16.msra.mxu0 %v232
    %250 = vmatprep.subr.bf16.mxu0 0
    %251 = vmatpush1.bf16.msra.mxu0 %v233
    %252 = vmatprep.subr.bf16.mxu0 0
    %253 = vmatpush1.bf16.msra.mxu0 %v234
    %254 = vmatprep.subr.bf16.mxu0 0
    %255 = vmatpush1.bf16.msra.mxu0 %v235
    %256 = vmatprep.subr.bf16.mxu0 0
    %257 = vmatpush1.bf16.msra.mxu0 %v236
    %258 = vmatprep.subr.bf16.mxu0 0
    %259 = vmatpush1.bf16.msra.mxu0 %v237
    %260 = vmatprep.subr.bf16.mxu0 0
    %261 = vmatpush1.bf16.msra.mxu0 %v238
    %262 = vmatprep.subr.bf16.mxu0 0
    %263 = vmatpush1.bf16.msra.mxu0 %v239
    %264 = vmatprep.subr.bf16.mxu0 0
    %265 = vmatpush1.bf16.msra.mxu0 0
    %266 = vmatprep.subr.bf16.mxu0 0
    %267 = vmatpush1.bf16.msra.mxu0 0
    %268 = vmatprep.subr.bf16.mxu0 0
    %269 = vmatpush1.bf16.msra.mxu0 0
    %270 = vmatprep.subr.bf16.mxu0 0
    %271 = vmatpush1.bf16.msra.mxu0 0
    %272 = vmatprep.subr.bf16.mxu0 0
    %273 = vmatpush1.bf16.msra.mxu0 0
    %274 = vmatprep.subr.bf16.mxu0 0
    %275 = vmatpush1.bf16.msra.mxu0 0
    %276 = vmatprep.subr.bf16.mxu0 0
    %277 = vmatpush1.bf16.msra.mxu0 0
    %278 = vmatprep.subr.bf16.mxu0 0
    %279 = vmatpush1.bf16.msra.mxu0 0
    %280 = vmatprep.mubr.bf16.mxu0 0
    %281 = vmatmul.mubr.bf16.gmra.mrb[0].mxu0 %v182
    %v282 = vpop.f32.mrb[0].mxu0
    %v283 = vadd.f32 0.0, %v282
    %v284 = vpop.f32.mrb[0].mxu0
    %v285 = vpop.f32.mrb[0].mxu0
    %v286 = vadd.f32 0.0, %v285
    %v287 = vpop.f32.mrb[0].mxu0
    %288 = vmatprep.mubr.bf16.mxu0 0
    %289 = vmatmul.mubr.bf16.gmra.mrb[0].mxu0 %v183
    %v290 = vpop.f32.mrb[0].mxu0
    %v291 = vadd.f32 0.0, %v290
    %v292 = vpop.f32.mrb[0].mxu0
    %v293 = vpop.f32.mrb[0].mxu0
    %v294 = vadd.f32 0.0, %v293
    %v295 = vpop.f32.mrb[0].mxu0
    %296 = vdwg.mxu0
    %v313 = vunpack.c.l.b16 %v129
    %v314 = vunpack.c.l.b16 %v130
    %v315 = vunpack.c.l.b16 %v131
    %v316 = vunpack.c.l.b16 %v132
    %v317 = vunpack.c.l.b16 %v133
    %v318 = vunpack.c.l.b16 %v134
    %v319 = vunpack.c.l.b16 %v135
    %v320 = vunpack.c.l.b16 %v136
    %v321 = vunpack.c.l.b16 %v137
    %v322 = vunpack.c.l.b16 %v138
    %v323 = vunpack.c.l.b16 %v139
    %v324 = vunpack.c.l.b16 %v140
    %v325 = vunpack.c.l.b16 %v141
    %v326 = vunpack.c.l.b16 %v142
    %v327 = vunpack.c.l.b16 %v143
    %v328 = vunpack.c.l.b16 %v144
    %v329 = vpack.c.b16 %v314, %v313
    %v330 = vpack.c.b16 %v316, %v315
    %v331 = vpack.c.b16 %v318, %v317
    %v332 = vpack.c.b16 %v320, %v319
    %v333 = vpack.c.b16 %v322, %v321
    %v334 = vpack.c.b16 %v324, %v323
    %v335 = vpack.c.b16 %v326, %v325
    %v336 = vpack.c.b16 %v328, %v327
    %345 = vmatprep.subr.bf16.mxu0 0
    %346 = vmatpush1.bf16.msra.mxu0 %v329
    %347 = vmatprep.subr.bf16.mxu0 0
    %348 = vmatpush1.bf16.msra.mxu0 %v330
    %349 = vmatprep.subr.bf16.mxu0 0
    %350 = vmatpush1.bf16.msra.mxu0 %v331
    %351 = vmatprep.subr.bf16.mxu0 0
    %352 = vmatpush1.bf16.msra.mxu0 %v332
    %353 = vmatprep.subr.bf16.mxu0 0
    %354 = vmatpush1.bf16.msra.mxu0 %v333
    %355 = vmatprep.subr.bf16.mxu0 0
    %356 = vmatpush1.bf16.msra.mxu0 %v334
    %357 = vmatprep.subr.bf16.mxu0 0
    %358 = vmatpush1.bf16.msra.mxu0 %v335
    %359 = vmatprep.subr.bf16.mxu0 0
    %360 = vmatpush1.bf16.msra.mxu0 %v336
    %361 = vmatprep.subr.bf16.mxu0 0
    %362 = vmatpush1.bf16.msra.mxu0 0
    %363 = vmatprep.subr.bf16.mxu0 0
    %364 = vmatpush1.bf16.msra.mxu0 0
    %365 = vmatprep.subr.bf16.mxu0 0
    %366 = vmatpush1.bf16.msra.mxu0 0
    %367 = vmatprep.subr.bf16.mxu0 0
    %368 = vmatpush1.bf16.msra.mxu0 0
    %369 = vmatprep.subr.bf16.mxu0 0
    %370 = vmatpush1.bf16.msra.mxu0 0
    %371 = vmatprep.subr.bf16.mxu0 0
    %372 = vmatpush1.bf16.msra.mxu0 0
    %373 = vmatprep.subr.bf16.mxu0 0
    %374 = vmatpush1.bf16.msra.mxu0 0
    %375 = vmatprep.subr.bf16.mxu0 0
    %376 = vmatpush1.bf16.msra.mxu0 0
    %377 = vmatprep.mubr.bf16.mxu0 0
    %378 = vmatmul.mubr.bf16.gmra.mrb[0].mxu0 %v126
    %v379 = vpop.f32.mrb[0].mxu0
    %v380 = vadd.f32 %v283, %v379
    %v381 = vpop.f32.mrb[0].mxu0
    %v382 = vpop.f32.mrb[0].mxu0
    %v383 = vadd.f32 %v286, %v382
    %v384 = vpop.f32.mrb[0].mxu0
    %385 = vmatprep.mubr.bf16.mxu0 0
    %386 = vmatmul.mubr.bf16.gmra.mrb[0].mxu0 %v127
    %v387 = vpop.f32.mrb[0].mxu0
    %v388 = vadd.f32 %v291, %v387
    %v389 = vpop.f32.mrb[0].mxu0
    %v390 = vpop.f32.mrb[0].mxu0
    %v391 = vadd.f32 %v294, %v390
    %v392 = vpop.f32.mrb[0].mxu0
    %393 = vdwg.mxu0
    %v394 = vrot.slane %v69, 1
    %v395 = vrot.slane %v70, 1
    %v396 = vrot.slane %v71, 1
    %v397 = vrot.slane %v72, 1
    %vm398 = vcmp.lt.s32.totalorder %v74, 7
    %v399 = vsel %vm398, %v396, %v397
    %v400 = vsel %vm398, %v395, %v396
    %v401 = vsel %vm398, %v394, %v395
    %v402 = vsel %vm398, %v397, %v394
    %v403 = vadd.s32 %v122, 1
    %v404 = vadd.s32 %v123, 1
    %v405 = vadd.s32 %v124, 1
    %v406 = vadd.s32 %v125, 1
    %vm407 = vcmp.ge.s32.totalorder %v403, 0
    %vm408 = vcmp.ge.s32.totalorder %v404, 0
    %vm409 = vcmp.ge.s32.totalorder %v405, 0
    %vm410 = vcmp.ge.s32.totalorder %v406, 0
    %vm411 = vcmp.lt.s32.totalorder %v403, 16
    %vm412 = vcmp.lt.s32.totalorder %v404, 16
    %vm413 = vcmp.lt.s32.totalorder %v405, 16
    %vm414 = vcmp.lt.s32.totalorder %v406, 16
    %vm415 = vmand %vm407, %vm411
    %vm416 = vmand %vm408, %vm412
    %vm417 = vmand %vm409, %vm413
    %vm418 = vmand %vm410, %vm414
    %v419 = vsel %vm415, 1, 0
    %v420 = vsel %vm416, 1, 0
    %v421 = vsel %vm417, 1, 0
    %v422 = vsel %vm418, 1, 0
    %vm423 = vcmp.eq.s32.totalorder %v419, 1
    %vm424 = vcmp.eq.s32.totalorder %v420, 1
    %vm425 = vcmp.eq.s32.totalorder %v421, 1
    %vm426 = vcmp.eq.s32.totalorder %v422, 1
    %v427 = vsel %vm423, %v401, 0.0
    %v428 = vsel %vm424, %v400, 0.0
    %v429 = vsel %vm425, %v399, 0.0
    %v430 = vsel %vm426, %v402, 0.0
    %v431 = vpack.c.bf16 %v428, %v427
    %v432 = vpack.c.bf16 %v430, %v429
    %s433 = scalar_lea.vmem [#allocation5], 128
    %v434 = vld [vmem:[%s433] sm:$0xf]
    %v435 = vld [vmem:[%s433 + $0x4] sm:$0xf]
    %v436 = vld [vmem:[%s433 + $0x8] sm:$0xf]
    %v437 = vld [vmem:[%s433 + $0xc] sm:$0xf]
    %v438 = vld [vmem:[%s433 + $0x10] sm:$0xf]
    %v439 = vld [vmem:[%s433 + $0x14] sm:$0xf]
    %v440 = vld [vmem:[%s433 + $0x18] sm:$0xf]
    %v441 = vld [vmem:[%s433 + $0x1c] sm:$0xf]
    %v442 = vld [vmem:[%s433 + $0x20] sm:$0xf]
    %v443 = vld [vmem:[%s433 + $0x24] sm:$0xf]
    %v444 = vld [vmem:[%s433 + $0x28] sm:$0xf]
    %v445 = vld [vmem:[%s433 + $0x2c] sm:$0xf]
    %v446 = vld [vmem:[%s433 + $0x30] sm:$0xf]
    %v447 = vld [vmem:[%s433 + $0x34] sm:$0xf]
    %v448 = vld [vmem:[%s433 + $0x38] sm:$0xf]
    %v449 = vld [vmem:[%s433 + $0x3c] sm:$0xf]
    %v466 = vunpack.c.l.b16 %v434
    %v467 = vunpack.c.l.b16 %v435
    %v468 = vunpack.c.l.b16 %v436
    %v469 = vunpack.c.l.b16 %v437
    %v470 = vunpack.c.l.b16 %v438
    %v471 = vunpack.c.l.b16 %v439
    %v472 = vunpack.c.l.b16 %v440
    %v473 = vunpack.c.l.b16 %v441
    %v474 = vunpack.c.l.b16 %v442
    %v475 = vunpack.c.l.b16 %v443
    %v476 = vunpack.c.l.b16 %v444
    %v477 = vunpack.c.l.b16 %v445
    %v478 = vunpack.c.l.b16 %v446
    %v479 = vunpack.c.l.b16 %v447
    %v480 = vunpack.c.l.b16 %v448
    %v481 = vunpack.c.l.b16 %v449
    %v482 = vpack.c.b16 %v467, %v466
    %v483 = vpack.c.b16 %v469, %v468
    %v484 = vpack.c.b16 %v471, %v470
    %v485 = vpack.c.b16 %v473, %v472
    %v486 = vpack.c.b16 %v475, %v474
    %v487 = vpack.c.b16 %v477, %v476
    %v488 = vpack.c.b16 %v479, %v478
    %v489 = vpack.c.b16 %v481, %v480
    %498 = vmatprep.subr.bf16.mxu0 0
    %499 = vmatpush1.bf16.msra.mxu0 %v482
    %500 = vmatprep.subr.bf16.mxu0 0
    %501 = vmatpush1.bf16.msra.mxu0 %v483
    %502 = vmatprep.subr.bf16.mxu0 0
    %503 = vmatpush1.bf16.msra.mxu0 %v484
    %504 = vmatprep.subr.bf16.mxu0 0
    %505 = vmatpush1.bf16.msra.mxu0 %v485
    %506 = vmatprep.subr.bf16.mxu0 0
    %507 = vmatpush1.bf16.msra.mxu0 %v486
    %508 = vmatprep.subr.bf16.mxu0 0
    %509 = vmatpush1.bf16.msra.mxu0 %v487
    %510 = vmatprep.subr.bf16.mxu0 0
    %511 = vmatpush1.bf16.msra.mxu0 %v488
    %512 = vmatprep.subr.bf16.mxu0 0
    %513 = vmatpush1.bf16.msra.mxu0 %v489
    %514 = vmatprep.subr.bf16.mxu0 0
    %515 = vmatpush1.bf16.msra.mxu0 0
    %516 = vmatprep.subr.bf16.mxu0 0
    %517 = vmatpush1.bf16.msra.mxu0 0
    %518 = vmatprep.subr.bf16.mxu0 0
    %519 = vmatpush1.bf16.msra.mxu0 0
    %520 = vmatprep.subr.bf16.mxu0 0
    %521 = vmatpush1.bf16.msra.mxu0 0
    %522 = vmatprep.subr.bf16.mxu0 0
    %523 = vmatpush1.bf16.msra.mxu0 0
    %524 = vmatprep.subr.bf16.mxu0 0
    %525 = vmatpush1.bf16.msra.mxu0 0
    %526 = vmatprep.subr.bf16.mxu0 0
    %527 = vmatpush1.bf16.msra.mxu0 0
    %528 = vmatprep.subr.bf16.mxu0 0
    %529 = vmatpush1.bf16.msra.mxu0 0
    %530 = vmatprep.mubr.bf16.mxu0 0
    %531 = vmatmul.mubr.bf16.gmra.mrb[0].mxu0 %v431
    %v532 = vpop.f32.mrb[0].mxu0
    %v533 = vadd.f32 0.0, %v532
    %v534 = vpop.f32.mrb[0].mxu0
    %v535 = vpop.f32.mrb[0].mxu0
    %v536 = vadd.f32 0.0, %v535
    %v537 = vpop.f32.mrb[0].mxu0
    %538 = vmatprep.mubr.bf16.mxu0 0
    %539 = vmatmul.mubr.bf16.gmra.mrb[0].mxu0 %v432
    %v540 = vpop.f32.mrb[0].mxu0
    %v541 = vadd.f32 0.0, %v540
    %v542 = vpop.f32.mrb[0].mxu0
    %v543 = vpop.f32.mrb[0].mxu0
    %v544 = vadd.f32 0.0, %v543
    %v545 = vpop.f32.mrb[0].mxu0
    %546 = vdwg.mxu0
    %v547 = vadd.f32 %v380, %v533
    %v548 = vadd.f32 %v383, %v536
    %v549 = vadd.f32 %v388, %v541
    %v550 = vadd.f32 %v391, %v544
    %v551 = vld [vmem:[%s3] sm:$0x1]
    %v553 = vlaneseq
    %v554 = vshrl.u32 %v553, 7
    %v555 = vsub.s32 0, %v554
    %v556 = vrot.slane %v551, %v555
    %v558 = vmul.f32 %v547, %v556
    %v559 = vmul.f32 %v548, %v556
    %v560 = vmul.f32 %v549, %v556
    %v561 = vmul.f32 %v550, %v556
    %v562 = vld [vmem:[%s4] sm:$0x1]
    %v564 = vlaneseq
    %v565 = vshrl.u32 %v564, 7
    %v566 = vsub.s32 0, %v565
    %v567 = vrot.slane %v562, %v566
    %v569 = vadd.f32 %v558, %v567
    %v570 = vadd.f32 %v559, %v567
    %v571 = vadd.f32 %v560, %v567
    %v572 = vadd.f32 %v561, %v567
    %v573 = vmax.f32 %v569, 0.0
    %v574 = vmax.f32 %v570, 0.0
    %v575 = vmax.f32 %v571, 0.0
    %v576 = vmax.f32 %v572, 0.0
    %v577 = vpack.c.bf16 %v574, %v573
    %v578 = vpack.c.bf16 %v576, %v575
    %s579 = scalar_lea.vmem [#allocation7], 64
    %v580 = vld [vmem:[%s579] sm:$0xf]
    %v581 = vld [vmem:[%s579 + $0x4] sm:$0xf]
    %v582 = vld [vmem:[%s579 + $0x8] sm:$0xf]
    %v583 = vld [vmem:[%s579 + $0xc] sm:$0xf]
    %v584 = vld [vmem:[%s579 + $0x10] sm:$0xf]
    %v585 = vld [vmem:[%s579 + $0x14] sm:$0xf]
    %v586 = vld [vmem:[%s579 + $0x18] sm:$0xf]
    %v587 = vld [vmem:[%s579 + $0x1c] sm:$0xf]
    %v588 = vld [vmem:[%s579 + $0x20] sm:$0xf]
    %v589 = vld [vmem:[%s579 + $0x24] sm:$0xf]
    %v590 = vld [vmem:[%s579 + $0x28] sm:$0xf]
    %v591 = vld [vmem:[%s579 + $0x2c] sm:$0xf]
    %v592 = vld [vmem:[%s579 + $0x30] sm:$0xf]
    %v593 = vld [vmem:[%s579 + $0x34] sm:$0xf]
    %v594 = vld [vmem:[%s579 + $0x38] sm:$0xf]
    %v595 = vld [vmem:[%s579 + $0x3c] sm:$0xf]
    %v596 = vrot.slane %v573, 7
    %v597 = vrot.slane %v574, 7
    %v598 = vrot.slane %v575, 7
    %v599 = vrot.slane %v576, 7
    %v600 = vsel %vm149, %v598, %v599
    %v601 = vsel %vm149, %v597, %v598
    %v602 = vsel %vm149, %v596, %v597
    %v603 = vsel %vm149, %v599, %v596
    %v604 = vsel %vm174, %v603, 0.0
    %v605 = vsel %vm175, %v602, 0.0
    %v606 = vsel %vm176, %v601, 0.0
    %v607 = vsel %vm177, %v600, 0.0
    %v608 = vpack.c.bf16 %v605, %v604
    %v609 = vpack.c.bf16 %v607, %v606
    %v610 = vld [vmem:[#allocation7] sm:$0xf]
    %v611 = vld [vmem:[#allocation7 + $0x4] sm:$0xf]
    %v612 = vld [vmem:[#allocation7 + $0x8] sm:$0xf]
    %v613 = vld [vmem:[#allocation7 + $0xc] sm:$0xf]
    %v614 = vld [vmem:[#allocation7 + $0x10] sm:$0xf]
    %v615 = vld [vmem:[#allocation7 + $0x14] sm:$0xf]
    %v616 = vld [vmem:[#allocation7 + $0x18] sm:$0xf]
    %v617 = vld [vmem:[#allocation7 + $0x1c] sm:$0xf]
    %v618 = vld [vmem:[#allocation7 + $0x20] sm:$0xf]
    %v619 = vld [vmem:[#allocation7 + $0x24] sm:$0xf]
    %v620 = vld [vmem:[#allocation7 + $0x28] sm:$0xf]
    %v621 = vld [vmem:[#allocation7 + $0x2c] sm:$0xf]
    %v622 = vld [vmem:[#allocation7 + $0x30] sm:$0xf]
    %v623 = vld [vmem:[#allocation7 + $0x34] sm:$0xf]
    %v624 = vld [vmem:[#allocation7 + $0x38] sm:$0xf]
    %v625 = vld [vmem:[#allocation7 + $0x3c] sm:$0xf]
    %v642 = vunpack.c.l.b16 %v610
    %v643 = vunpack.c.l.b16 %v611
    %v644 = vunpack.c.l.b16 %v612
    %v645 = vunpack.c.l.b16 %v613
    %v646 = vunpack.c.l.b16 %v614
    %v647 = vunpack.c.l.b16 %v615
    %v648 = vunpack.c.l.b16 %v616
    %v649 = vunpack.c.l.b16 %v617
    %v650 = vunpack.c.l.b16 %v618
    %v651 = vunpack.c.l.b16 %v619
    %v652 = vunpack.c.l.b16 %v620
    %v653 = vunpack.c.l.b16 %v621
    %v654 = vunpack.c.l.b16 %v622
    %v655 = vunpack.c.l.b16 %v623
    %v656 = vunpack.c.l.b16 %v624
    %v657 = vunpack.c.l.b16 %v625
    %v658 = vpack.c.b16 %v643, %v642
    %v659 = vpack.c.b16 %v645, %v644
    %v660 = vpack.c.b16 %v647, %v646
    %v661 = vpack.c.b16 %v649, %v648
    %v662 = vpack.c.b16 %v651, %v650
    %v663 = vpack.c.b16 %v653, %v652
    %v664 = vpack.c.b16 %v655, %v654
    %v665 = vpack.c.b16 %v657, %v656
    %674 = vmatprep.subr.bf16.mxu0 0
    %675 = vmatpush1.bf16.msra.mxu0 %v658
    %676 = vmatprep.subr.bf16.mxu0 0
    %677 = vmatpush1.bf16.msra.mxu0 %v659
    %678 = vmatprep.subr.bf16.mxu0 0
    %679 = vmatpush1.bf16.msra.mxu0 %v660
    %680 = vmatprep.subr.bf16.mxu0 0
    %681 = vmatpush1.bf16.msra.mxu0 %v661
    %682 = vmatprep.subr.bf16.mxu0 0
    %683 = vmatpush1.bf16.msra.mxu0 %v662
    %684 = vmatprep.subr.bf16.mxu0 0
    %685 = vmatpush1.bf16.msra.mxu0 %v663
    %686 = vmatprep.subr.bf16.mxu0 0
    %687 = vmatpush1.bf16.msra.mxu0 %v664
    %688 = vmatprep.subr.bf16.mxu0 0
    %689 = vmatpush1.bf16.msra.mxu0 %v665
    %690 = vmatprep.subr.bf16.mxu0 0
    %691 = vmatpush1.bf16.msra.mxu0 0
    %692 = vmatprep.subr.bf16.mxu0 0
    %693 = vmatpush1.bf16.msra.mxu0 0
    %694 = vmatprep.subr.bf16.mxu0 0
    %695 = vmatpush1.bf16.msra.mxu0 0
    %696 = vmatprep.subr.bf16.mxu0 0
    %697 = vmatpush1.bf16.msra.mxu0 0
    %698 = vmatprep.subr.bf16.mxu0 0
    %699 = vmatpush1.bf16.msra.mxu0 0
    %700 = vmatprep.subr.bf16.mxu0 0
    %701 = vmatpush1.bf16.msra.mxu0 0
    %702 = vmatprep.subr.bf16.mxu0 0
    %703 = vmatpush1.bf16.msra.mxu0 0
    %704 = vmatprep.subr.bf16.mxu0 0
    %705 = vmatpush1.bf16.msra.mxu0 0
    %706 = vmatprep.mubr.bf16.mxu0 0
    %707 = vmatmul.mubr.bf16.gmra.mrb[0].mxu0 %v608
    %v708 = vpop.f32.mrb[0].mxu0
    %v709 = vadd.f32 0.0, %v708
    %v710 = vpop.f32.mrb[0].mxu0
    %v711 = vpop.f32.mrb[0].mxu0
    %v712 = vadd.f32 0.0, %v711
    %v713 = vpop.f32.mrb[0].mxu0
    %714 = vmatprep.mubr.bf16.mxu0 0
    %715 = vmatmul.mubr.bf16.gmra.mrb[0].mxu0 %v609
    %v716 = vpop.f32.mrb[0].mxu0
    %v717 = vadd.f32 0.0, %v716
    %v718 = vpop.f32.mrb[0].mxu0
    %v719 = vpop.f32.mrb[0].mxu0
    %v720 = vadd.f32 0.0, %v719
    %v721 = vpop.f32.mrb[0].mxu0
    %722 = vdwg.mxu0
    %v739 = vunpack.c.l.b16 %v580
    %v740 = vunpack.c.l.b16 %v581
    %v741 = vunpack.c.l.b16 %v582
    %v742 = vunpack.c.l.b16 %v583
    %v743 = vunpack.c.l.b16 %v584
    %v744 = vunpack.c.l.b16 %v585
    %v745 = vunpack.c.l.b16 %v586
    %v746 = vunpack.c.l.b16 %v587
    %v747 = vunpack.c.l.b16 %v588
    %v748 = vunpack.c.l.b16 %v589
    %v749 = vunpack.c.l.b16 %v590
    %v750 = vunpack.c.l.b16 %v591
    %v751 = vunpack.c.l.b16 %v592
    %v752 = vunpack.c.l.b16 %v593
    %v753 = vunpack.c.l.b16 %v594
    %v754 = vunpack.c.l.b16 %v595
    %v755 = vpack.c.b16 %v740, %v739
    %v756 = vpack.c.b16 %v742, %v741
    %v757 = vpack.c.b16 %v744, %v743
    %v758 = vpack.c.b16 %v746, %v745
    %v759 = vpack.c.b16 %v748, %v747
    %v760 = vpack.c.b16 %v750, %v749
    %v761 = vpack.c.b16 %v752, %v751
    %v762 = vpack.c.b16 %v754, %v753
    %771 = vmatprep.subr.bf16.mxu0 0
    %772 = vmatpush1.bf16.msra.mxu0 %v755
    %773 = vmatprep.subr.bf16.mxu0 0
    %774 = vmatpush1.bf16.msra.mxu0 %v756
    %775 = vmatprep.subr.bf16.mxu0 0
    %776 = vmatpush1.bf16.msra.mxu0 %v757
    %777 = vmatprep.subr.bf16.mxu0 0
    %778 = vmatpush1.bf16.msra.mxu0 %v758
    %779 = vmatprep.subr.bf16.mxu0 0
    %780 = vmatpush1.bf16.msra.mxu0 %v759
    %781 = vmatprep.subr.bf16.mxu0 0
    %782 = vmatpush1.bf16.msra.mxu0 %v760
    %783 = vmatprep.subr.bf16.mxu0 0
    %784 = vmatpush1.bf16.msra.mxu0 %v761
    %785 = vmatprep.subr.bf16.mxu0 0
    %786 = vmatpush1.bf16.msra.mxu0 %v762
    %787 = vmatprep.subr.bf16.mxu0 0
    %788 = vmatpush1.bf16.msra.mxu0 0
    %789 = vmatprep.subr.bf16.mxu0 0
    %790 = vmatpush1.bf16.msra.mxu0 0
    %791 = vmatprep.subr.bf16.mxu0 0
    %792 = vmatpush1.bf16.msra.mxu0 0
    %793 = vmatprep.subr.bf16.mxu0 0
    %794 = vmatpush1.bf16.msra.mxu0 0
    %795 = vmatprep.subr.bf16.mxu0 0
    %796 = vmatpush1.bf16.msra.mxu0 0
    %797 = vmatprep.subr.bf16.mxu0 0
    %798 = vmatpush1.bf16.msra.mxu0 0
    %799 = vmatprep.subr.bf16.mxu0 0
    %800 = vmatpush1.bf16.msra.mxu0 0
    %801 = vmatprep.subr.bf16.mxu0 0
    %802 = vmatpush1.bf16.msra.mxu0 0
    %803 = vmatprep.mubr.bf16.mxu0 0
    %804 = vmatmul.mubr.bf16.gmra.mrb[0].mxu0 %v577
    %v805 = vpop.f32.mrb[0].mxu0
    %v806 = vadd.f32 %v709, %v805
    %v807 = vpop.f32.mrb[0].mxu0
    %v808 = vpop.f32.mrb[0].mxu0
    %v809 = vadd.f32 %v712, %v808
    %v810 = vpop.f32.mrb[0].mxu0
    %811 = vmatprep.mubr.bf16.mxu0 0
    %812 = vmatmul.mubr.bf16.gmra.mrb[0].mxu0 %v578
    %v813 = vpop.f32.mrb[0].mxu0
    %v814 = vadd.f32 %v717, %v813
    %v815 = vpop.f32.mrb[0].mxu0
    %v816 = vpop.f32.mrb[0].mxu0
    %v817 = vadd.f32 %v720, %v816
    %v818 = vpop.f32.mrb[0].mxu0
    %819 = vdwg.mxu0
    %v820 = vrot.slane %v573, 1
    %v821 = vrot.slane %v574, 1
    %v822 = vrot.slane %v575, 1
    %v823 = vrot.slane %v576, 1
    %v824 = vsel %vm398, %v822, %v823
    %v825 = vsel %vm398, %v821, %v822
    %v826 = vsel %vm398, %v820, %v821
    %v827 = vsel %vm398, %v823, %v820
    %v828 = vsel %vm423, %v826, 0.0
    %v829 = vsel %vm424, %v825, 0.0
    %v830 = vsel %vm425, %v824, 0.0
    %v831 = vsel %vm426, %v827, 0.0
    %v832 = vpack.c.bf16 %v829, %v828
    %v833 = vpack.c.bf16 %v831, %v830
    %s834 = scalar_lea.vmem [#allocation7], 128
    %v835 = vld [vmem:[%s834] sm:$0xf]
    %v836 = vld [vmem:[%s834 + $0x4] sm:$0xf]
    %v837 = vld [vmem:[%s834 + $0x8] sm:$0xf]
    %v838 = vld [vmem:[%s834 + $0xc] sm:$0xf]
    %v839 = vld [vmem:[%s834 + $0x10] sm:$0xf]
    %v840 = vld [vmem:[%s834 + $0x14] sm:$0xf]
    %v841 = vld [vmem:[%s834 + $0x18] sm:$0xf]
    %v842 = vld [vmem:[%s834 + $0x1c] sm:$0xf]
    %v843 = vld [vmem:[%s834 + $0x20] sm:$0xf]
    %v844 = vld [vmem:[%s834 + $0x24] sm:$0xf]
    %v845 = vld [vmem:[%s834 + $0x28] sm:$0xf]
    %v846 = vld [vmem:[%s834 + $0x2c] sm:$0xf]
    %v847 = vld [vmem:[%s834 + $0x30] sm:$0xf]
    %v848 = vld [vmem:[%s834 + $0x34] sm:$0xf]
    %v849 = vld [vmem:[%s834 + $0x38] sm:$0xf]
    %v850 = vld [vmem:[%s834 + $0x3c] sm:$0xf]
    %v867 = vunpack.c.l.b16 %v835
    %v868 = vunpack.c.l.b16 %v836
    %v869 = vunpack.c.l.b16 %v837
    %v870 = vunpack.c.l.b16 %v838
    %v871 = vunpack.c.l.b16 %v839
    %v872 = vunpack.c.l.b16 %v840
    %v873 = vunpack.c.l.b16 %v841
    %v874 = vunpack.c.l.b16 %v842
    %v875 = vunpack.c.l.b16 %v843
    %v876 = vunpack.c.l.b16 %v844
    %v877 = vunpack.c.l.b16 %v845
    %v878 = vunpack.c.l.b16 %v846
    %v879 = vunpack.c.l.b16 %v847
    %v880 = vunpack.c.l.b16 %v848
    %v881 = vunpack.c.l.b16 %v849
    %v882 = vunpack.c.l.b16 %v850
    %v883 = vpack.c.b16 %v868, %v867
    %v884 = vpack.c.b16 %v870, %v869
    %v885 = vpack.c.b16 %v872, %v871
    %v886 = vpack.c.b16 %v874, %v873
    %v887 = vpack.c.b16 %v876, %v875
    %v888 = vpack.c.b16 %v878, %v877
    %v889 = vpack.c.b16 %v880, %v879
    %v890 = vpack.c.b16 %v882, %v881
    %899 = vmatprep.subr.bf16.mxu0 0
    %900 = vmatpush1.bf16.msra.mxu0 %v883
    %901 = vmatprep.subr.bf16.mxu0 0
    %902 = vmatpush1.bf16.msra.mxu0 %v884
    %903 = vmatprep.subr.bf16.mxu0 0
    %904 = vmatpush1.bf16.msra.mxu0 %v885
    %905 = vmatprep.subr.bf16.mxu0 0
    %906 = vmatpush1.bf16.msra.mxu0 %v886
    %907 = vmatprep.subr.bf16.mxu0 0
    %908 = vmatpush1.bf16.msra.mxu0 %v887
    %909 = vmatprep.subr.bf16.mxu0 0
    %910 = vmatpush1.bf16.msra.mxu0 %v888
    %911 = vmatprep.subr.bf16.mxu0 0
    %912 = vmatpush1.bf16.msra.mxu0 %v889
    %913 = vmatprep.subr.bf16.mxu0 0
    %914 = vmatpush1.bf16.msra.mxu0 %v890
    %915 = vmatprep.subr.bf16.mxu0 0
    %916 = vmatpush1.bf16.msra.mxu0 0
    %917 = vmatprep.subr.bf16.mxu0 0
    %918 = vmatpush1.bf16.msra.mxu0 0
    %919 = vmatprep.subr.bf16.mxu0 0
    %920 = vmatpush1.bf16.msra.mxu0 0
    %921 = vmatprep.subr.bf16.mxu0 0
    %922 = vmatpush1.bf16.msra.mxu0 0
    %923 = vmatprep.subr.bf16.mxu0 0
    %924 = vmatpush1.bf16.msra.mxu0 0
    %925 = vmatprep.subr.bf16.mxu0 0
    %926 = vmatpush1.bf16.msra.mxu0 0
    %927 = vmatprep.subr.bf16.mxu0 0
    %928 = vmatpush1.bf16.msra.mxu0 0
    %929 = vmatprep.subr.bf16.mxu0 0
    %930 = vmatpush1.bf16.msra.mxu0 0
    %931 = vmatprep.mubr.bf16.mxu0 0
    %932 = vmatmul.mubr.bf16.gmra.mrb[0].mxu0 %v832
    %v933 = vpop.f32.mrb[0].mxu0
    %v934 = vadd.f32 0.0, %v933
    %v935 = vpop.f32.mrb[0].mxu0
    %v936 = vpop.f32.mrb[0].mxu0
    %v937 = vadd.f32 0.0, %v936
    %v938 = vpop.f32.mrb[0].mxu0
    %939 = vmatprep.mubr.bf16.mxu0 0
    %940 = vmatmul.mubr.bf16.gmra.mrb[0].mxu0 %v833
    %v941 = vpop.f32.mrb[0].mxu0
    %v942 = vadd.f32 0.0, %v941
    %v943 = vpop.f32.mrb[0].mxu0
    %v944 = vpop.f32.mrb[0].mxu0
    %v945 = vadd.f32 0.0, %v944
    %v946 = vpop.f32.mrb[0].mxu0
    %947 = vdwg.mxu0
    %v948 = vadd.f32 %v806, %v934
    %v949 = vadd.f32 %v809, %v937
    %v950 = vadd.f32 %v814, %v942
    %v951 = vadd.f32 %v817, %v945
    %v952 = vld [vmem:[%s5] sm:$0x1]
    %v954 = vlaneseq
    %v955 = vshrl.u32 %v954, 7
    %v956 = vsub.s32 0, %v955
    %v957 = vrot.slane %v952, %v956
    %v959 = vmul.f32 %v948, %v957
    %v960 = vmul.f32 %v949, %v957
    %v961 = vmul.f32 %v950, %v957
    %v962 = vmul.f32 %v951, %v957
    %v963 = vld [vmem:[%s6] sm:$0x1]
    %v965 = vlaneseq
    %v966 = vshrl.u32 %v965, 7
    %v967 = vsub.s32 0, %v966
    %v968 = vrot.slane %v963, %v967
    %v970 = vadd.f32 %v959, %v968
    %v971 = vadd.f32 %v960, %v968
    %v972 = vadd.f32 %v961, %v968
    %v973 = vadd.f32 %v962, %v968
    %v974 = vadd.f32 %v970, %v69
    %v975 = vadd.f32 %v971, %v70
    %v976 = vadd.f32 %v972, %v71
    %v977 = vadd.f32 %v973, %v72
    %v978 = vmax.f32 %v974, 0.0
    %v979 = vmax.f32 %v975, 0.0
    %v980 = vmax.f32 %v976, 0.0
    %v981 = vmax.f32 %v977, 0.0
    %982 = vst [vmem:[#allocation8] sm:$0xff] %v978
    %983 = vst [vmem:[#allocation8 + $0x8] sm:$0xff] %v979
    %984 = vst [vmem:[#allocation8 + $0x10] sm:$0xff] %v980
    %985 = vst [vmem:[#allocation8 + $0x18] sm:$0xff] %v981
    // Predicated region
    $region42: #{tpu_custom_call.1} parent=1 // pred_check
      _
    $region43: #{tpu_custom_call.1} parent=1 // pred_check_branch
      %987 = sbr.rel (0) target = $region45
    $region44: #{tpu_custom_call.1} parent=1 // pred_region
      %s989 = ssub.s32 512, 512
      %990 = vsyncadd [#allocation4], %s989
      %s991 = sshll.u32 [#allocation8], 4
      %s992 = int_to_ptr.vmem [resolvable:$true] %s991
      %997 = dma.vmem_to_hbm [thread:$0]  %s992, 512, %s7, [#allocation4], 128, 128, 8
    $region45: #{tpu_custom_call.1} parent=1 // pred_fallthru
      _
    // Predicated region
    $region46: #{tpu_custom_call.1} parent=1 // pred_check
      _
    $region47: #{tpu_custom_call.1} parent=1 // pred_check_branch
      %999 = sbr.rel (0) target = $region49
    $region48: #{tpu_custom_call.1} parent=1 // pred_region
      %1000 = dma.done [#allocation4], 512
    $region49: #{tpu_custom_call.1} parent=1 // pred_fallthru
      _
    %1001 = vsyncpa [#allocation3], 1
    %1002 = vsyncpa [#allocation6], 1
    %1003 = vsyncpa [#allocation4], 1

</llo_original>
